<compile_context>
chip_gen: v7x
topology: tpu7x:2x2x1
jax: 0.10.0
libtpu: 0.0.40
codegen_flags: <defaults>
</compile_context>

<pallas_src>
import jax
import jax.numpy as jnp
from jax import lax
from jax.experimental import pallas as pl
from jax.experimental.pallas import tpu as pltpu

_LANE = 128
_SUBLANE = 8


def _vmem_capacity_bytes():
    try:
        info = pltpu.get_tpu_info()
        cap = getattr(info, "vmem_capacity_bytes", None)
        if cap:
            return int(cap)
    except Exception:
        pass
    return 128 << 20  # v5e/v6e default


def _bcast_kernel(w_ref, o_ref):
    # w_ref: (Rt, C) table tile; o_ref: (Bt, Rt, C) output tile.
    # Store one (Rt, C) slice per batch element: keeps the vreg live set at a single
    # table tile instead of materializing the full (Bt, Rt, C) broadcast; the extra
    # VMEM reads of w_ref ride the spare vld slots while the real limiter is the
    # HBM writeback DMA of o_ref.
    bt = o_ref.shape[0]
    if bt <= 8:
        for b in range(bt):            # small: fully unrolled
            o_ref[b] = w_ref[...]
    else:
        def body(b, carry):
            o_ref[b] = w_ref[...]
            return carry
        lax.fori_loop(0, bt, body, 0)


def _broadcast_table(table2d, batch):
    """Returns (batch, R, C) = table2d broadcast over a new leading batch dim."""
    R, C = table2d.shape
    itemsize = jnp.dtype(table2d.dtype).itemsize
    row_bytes = C * itemsize
    table_bytes = R * row_bytes

    # Chip-aware budgets (blocks are double-buffered by the pipeline).
    cap = _vmem_capacity_bytes()
    is_small_vmem = cap <= (64 << 20)              # v7x: 64 MiB per TensorCore
    out_block_budget = (8 << 20) if is_small_vmem else (12 << 20)
    in_block_budget = 2 << 20

    # ---- row tile Rt: full table if it fits the input budget, else a multiple of 8;
    # ragged tail blocks are handled (masked) by the pl.cdiv grid. ----
    if table_bytes <= in_block_budget:
        Rt = R
    else:
        Rt = max(_SUBLANE, (in_block_budget // row_bytes) // _SUBLANE * _SUBLANE)
        Rt = min(R, Rt)

    # ---- batch tile Bt: as many broadcast copies per step as fit the output budget.
    # Bt is a leading block dim (no (8,128) constraint); ragged batch tail is masked. ----
    blk_bytes = Rt * row_bytes
    Bt = max(1, min(batch, out_block_budget // max(1, blk_bytes)))

    nr = pl.cdiv(R, Rt)
    nb = pl.cdiv(batch, Bt)

    in_blk = Rt * row_bytes
    out_blk = Bt * Rt * row_bytes
    needed = 2 * in_blk + 2 * out_blk              # double-buffered input + output
    vmem_limit = int(min(int(0.75 * cap), max(32 << 20, needed + (8 << 20))))

    return pl.pallas_call(
        _bcast_kernel,
        out_shape=jax.ShapeDtypeStruct((batch, R, C), table2d.dtype),
        grid_spec=pltpu.PrefetchScalarGridSpec(
            num_scalar_prefetch=0,
            # Batch innermost: input block index (r, 0) is unchanged across the inner
            # axis, so Pallas skips re-fetching the table tile between those steps.
            grid=(nr, nb),
            in_specs=[pl.BlockSpec((Rt, C), lambda r, b: (r, 0))],
            out_specs=pl.BlockSpec((Bt, Rt, C), lambda r, b: (b, r, 0)),
        ),
        compiler_params=pltpu.CompilerParams(
            dimension_semantics=("parallel", "parallel"),
            vmem_limit_bytes=vmem_limit,
        ),
        cost_estimate=pl.CostEstimate(
            flops=0,
            transcendentals=0,
            # One table read + `batch` table-sized writes (matches post-reorder traffic).
            bytes_accessed=(batch + 1) * R * C * itemsize,
        ),
    )(table2d)


def positional_embedding_forward(x, pe_weight):
    """Returns (batch, max_len, d_model) = pe_weight broadcast over batch of x."""
    batch = x.shape[0]
    max_len, d_model = pe_weight.shape
    flat = max_len * d_model

    if d_model % _LANE == 0:
        # d_model already lane-aligned: broadcast the table directly.
        return _broadcast_table(pe_weight, batch)

    if flat % _LANE == 0:
        # Lane-dense reslab: view the contiguous table as (flat//128, 128) so output
        # stores are unmasked full-lane writes. Row-major reshapes here are pure
        # collapses/splits (no padding, no data movement).
        rows = flat // _LANE
        out = _broadcast_table(pe_weight.reshape(rows, _LANE), batch)
        return out.reshape(batch, max_len, d_model)

    # TODO(synk): flat % 128 != 0 — lane-partial (masked) stores on every block; could
    # tile the flattened table in 128-wide chunks so only a single tail block is masked.
    return _broadcast_table(pe_weight, batch)


if __name__ == "__main__":
    # Small shapes consistent with the module: batch=2, max_len=8, d_model=32.
    batch = 2
    max_len = 8
    d_model = 32

    key = jax.random.PRNGKey(0)
    k_w, k_x = jax.random.split(key)

    # nn.Embedding default init ~ N(0, 1); deterministic synthetic weights.
    pe_weight = jax.random.normal(k_w, (max_len, d_model), dtype=jnp.float32)

    # x: only its batch dim matters (e.g. token ids of shape (batch, seq)).
    x = jax.random.randint(k_x, (batch, max_len), 0, max_len, dtype=jnp.int32)

    out = positional_embedding_forward(x, pe_weight)
    out = jax.block_until_ready(out)

    # Reference check: broadcast of the weight table over batch.
    ref = jnp.broadcast_to(pe_weight[None, :, :], (batch, max_len, d_model))
    assert out.shape == (batch, max_len, d_model), out.shape
    assert out.dtype == pe_weight.dtype
    assert bool(jnp.allclose(out, ref)), "mismatch vs reference broadcast"

    print("KERNEL_OK")
</pallas_src>

<mosaic_0001>
module attributes {stable_mosaic.version = 11 : i64} {
  func.func @_bcast_kernel(%arg0: i32, %arg1: i32, %arg2: memref<2x128xf32, #tpu.memory_space<vmem>>, %arg3: memref<2x2x128xf32, #tpu.memory_space<vmem>>) attributes {dimension_semantics = [#tpu.dimension_semantics<parallel>, #tpu.dimension_semantics<parallel>], iteration_bounds = array<i64: 1, 1>, scalar_prefetch = 0 : i64, scratch_operands = 0 : i64, tpu.core_type = #tpu.core_type<tc>, window_params = [{transform_indices = @transform_0, window_bounds = array<i64: 2, 128>}, {transform_indices = @transform_1, window_bounds = array<i64: 2, 2, 128>}]} {
    %c0 = arith.constant 0 : index
    %c0_0 = arith.constant 0 : index
    %0 = vector.load %arg2[%c0, %c0_0] : memref<2x128xf32, #tpu.memory_space<vmem>>, vector<2x128xf32>
    %c0_1 = arith.constant 0 : index
    %c0_2 = arith.constant 0 : index
    %c0_3 = arith.constant 0 : index
    %1 = vector.load %arg3[%c0_1, %c0_2, %c0_3] : memref<2x2x128xf32, #tpu.memory_space<vmem>>, vector<1x2x128xf32>
    %2 = vector.shape_cast %1 : vector<1x2x128xf32> to vector<2x128xf32>
    %3 = vector.shape_cast %0 : vector<2x128xf32> to vector<1x2x128xf32>
    tpu.vector_store %arg3[%c0_1, %c0_2, %c0_3], %3 {strides = array<i32>} : memref<2x2x128xf32, #tpu.memory_space<vmem>>, vector<1x2x128xf32>,
    %c0_4 = arith.constant 0 : index
    %c0_5 = arith.constant 0 : index
    %4 = vector.load %arg2[%c0_4, %c0_5] : memref<2x128xf32, #tpu.memory_space<vmem>>, vector<2x128xf32>
    %c1 = arith.constant 1 : index
    %c0_6 = arith.constant 0 : index
    %c0_7 = arith.constant 0 : index
    %5 = vector.load %arg3[%c1, %c0_6, %c0_7] : memref<2x2x128xf32, #tpu.memory_space<vmem>>, vector<1x2x128xf32>
    %6 = vector.shape_cast %5 : vector<1x2x128xf32> to vector<2x128xf32>
    %7 = vector.shape_cast %4 : vector<2x128xf32> to vector<1x2x128xf32>
    tpu.vector_store %arg3[%c1, %c0_6, %c0_7], %7 {strides = array<i32>} : memref<2x2x128xf32, #tpu.memory_space<vmem>>, vector<1x2x128xf32>,
    return
  }
  func.func @transform_0(%arg0: i32, %arg1: i32) -> (i32, i32) {
    %c0_i32 = arith.constant 0 : i32
    %c0_i32_0 = arith.constant 0 : i32
    return %arg0, %c0_i32 : i32, i32
  }
  func.func @transform_1(%arg0: i32, %arg1: i32) -> (i32, i32, i32) {
    %c0_i32 = arith.constant 0 : i32
    %c0_i32_0 = arith.constant 0 : i32
    return %arg1, %arg0, %c0_i32 : i32, i32, i32
  }
}

</mosaic_0001>

<llo_original>
// kernel: tpu_custom_call.1
$region0: #{tpu_custom_call.1}
  #allocation0 [shape = 'u32[]', space=smem, size = 0x4, offset = 0x4, fixed_abs, tag = 'smem constant byte address 0x4 - core index']
  #allocation1 [shape = 'u32[144,128]{1,0:T(1,128)}', space=vmem, size = 0x12000, scoped, tag = 'internal scratch']
  %s0 = inlined_call_operand.hbm [shape: f32[2,128], index: 0, kind: input, shape index: {}]
  %s1 = inlined_call_operand.hbm [shape: f32[2,2,128], index: 1, kind: output, shape index: {}]
  %s2 = sld [smem:[#allocation0]]
  $region18: #{tpu_custom_call.1} parent=0
    _
  %s4 = ssub.s32 1, %s2
  %s5 = scalar_select 0, %s4, %s2
  $region1: #{tpu_custom_call.1} parent=0
    #allocation2 [shape = 'u8[1024]{0}', space=vmem, size = 0x400, scoped, tag = 'input window, operand 0, single buffered']
    #allocation3 [shape = 's32[1]{0}', space=sflag, size = 0x4, scoped, tag = 'scoped memory for tpu_custom_call.1']
    #allocation4 [shape = 's32[1]{0}', space=sflag, size = 0x4, scoped, tag = 'scoped memory for tpu_custom_call.1']
    #allocation5 [shape = 'u8[2048]{0}', space=vmem, size = 0x800, scoped, tag = 'output window, operand 0, single buffered']
    %6 = vsyncpa [#allocation3], 0
    %7 = vsyncpa [#allocation4], 0
    // Predicated region
    $region2: #{tpu_custom_call.1} parent=1 // pred_check
      _
    $region3: #{tpu_custom_call.1} parent=1 // pred_check_branch
      %9 = sbr.rel (0) target = $region5
    $region4: #{tpu_custom_call.1} parent=1 // pred_region
      %s11 = ssub.s32 32, 32
      %12 = vsyncadd [#allocation3], %s11
      %s14 = sshll.u32 [#allocation2], 4
      %s15 = int_to_ptr.vmem [resolvable:$true] %s14
      %17 = dma.hbm_to_vmem [thread:$0]  %s0, 32, %s15, [#allocation3]
    $region5: #{tpu_custom_call.1} parent=1 // pred_fallthru
      _
    // Predicated region
    $region6: #{tpu_custom_call.1} parent=1 // pred_check
      _
    $region7: #{tpu_custom_call.1} parent=1 // pred_check_branch
      %19 = sbr.rel (0) target = $region9
    $region8: #{tpu_custom_call.1} parent=1 // pred_region
      %20 = dma.done [#allocation3], 32
    $region9: #{tpu_custom_call.1} parent=1 // pred_fallthru
      _
    %v21 = vld [vmem:[#allocation2] sm:$0x3]
    %22 = vst [vmem:[#allocation5] sm:$0x3] %v21
    %v23 = vld [vmem:[#allocation2] sm:$0x3]
    %s24 = scalar_lea.vmem [#allocation5], 2
    %25 = vst [vmem:[%s24] sm:$0x3] %v23
    // Predicated region
    $region10: #{tpu_custom_call.1} parent=1 // pred_check
      _
    $region11: #{tpu_custom_call.1} parent=1 // pred_check_branch
      %27 = sbr.rel (0) target = $region13
    $region12: #{tpu_custom_call.1} parent=1 // pred_region
      %s29 = ssub.s32 64, 64
      %30 = vsyncadd [#allocation4], %s29
      %s31 = sshll.u32 [#allocation5], 4
      %s32 = int_to_ptr.vmem [resolvable:$true] %s31
      %37 = dma.vmem_to_hbm [thread:$0]  %s32, 64, %s1, [#allocation4], 32, 32, 2
    $region13: #{tpu_custom_call.1} parent=1 // pred_fallthru
      _
    // Predicated region
    $region14: #{tpu_custom_call.1} parent=1 // pred_check
      _
    $region15: #{tpu_custom_call.1} parent=1 // pred_check_branch
      %39 = sbr.rel (0) target = $region17
    $region16: #{tpu_custom_call.1} parent=1 // pred_region
      %40 = dma.done [#allocation4], 64
    $region17: #{tpu_custom_call.1} parent=1 // pred_fallthru
      _
    %41 = vsyncpa [#allocation3], 1
    %42 = vsyncpa [#allocation4], 1

</llo_original>
